<compile_context>
chip_gen: v6e
topology: v6e:2x2x1
jax: 0.10.0
libtpu: 0.0.40
codegen_flags: <defaults>
</compile_context>

<pallas_src>
import jax
import jax.numpy as jnp
from jax import lax
from jax.experimental import pallas as pl
from jax.experimental.pallas import tpu as pltpu

LN_EPS = 1e-12  # HuggingFace BERT LayerNorm default eps


def _round_up(n, m):
    return ((n + m - 1) // m) * m


def _head_kernel(x_ref, w1_ref, b1_ref, g_ref, beta_ref, w2_ref, b2_ref, o_ref):
    # x_ref: (TM, H) row tile (bf16 or f32). Weights/biases are resident full blocks.

    # ---- transform.dense: x @ W1 + b1  (MXU, f32 accumulate) ----
    h = jnp.dot(x_ref[...], w1_ref[...], preferred_element_type=jnp.float32)
    h = h + b1_ref[...]

    # ---- transform.transform_act_fn: exact (erf-based) GELU, f32 on VPU/EUP ----
    h = 0.5 * h * (1.0 + lax.erf(h * jnp.float32(0.7071067811865476)))

    # ---- transform.LayerNorm over last dim (single-pass sum / sum-of-squares) ----
    inv_h = jnp.float32(1.0 / h.shape[-1])
    s1 = jnp.sum(h, axis=-1, keepdims=True)
    s2 = jnp.sum(h * h, axis=-1, keepdims=True)
    mean = s1 * inv_h
    var = jnp.maximum(s2 * inv_h - mean * mean, 0.0)
    h = (h - mean) * lax.rsqrt(var + jnp.float32(LN_EPS))
    h = h * g_ref[...] + beta_ref[...]

    # ---- decoder: h @ W2 + b2 (MXU; bf16 operands when enabled, f32 accumulate) ----
    y = jnp.dot(h.astype(w2_ref.dtype), w2_ref[...], preferred_element_type=jnp.float32)
    y = y + b2_ref[...]

    # ---- L2 normalize along last dim ----
    # NOTE: no epsilon, matching the PyTorch module's explicit formula.
    # Padded output columns are exactly zero, so they do not affect the norm.
    inv_norm = lax.rsqrt(jnp.sum(y * y, axis=-1, keepdims=True))
    o_ref[...] = (y * inv_norm).astype(o_ref.dtype)


def _build_call(n_rows, H, C_pad, block_rows, out_dtype,
                single_buffer_weights, vmem_limit):
    full = lambda i: (0, 0)  # weights/biases: same full block every grid step
    w_kwargs = dict(pipeline_mode=pl.Buffered(1)) if single_buffer_weights else {}
    return pl.pallas_call(
        _head_kernel,
        out_shape=jax.ShapeDtypeStruct((n_rows, C_pad), out_dtype),
        grid_spec=pltpu.PrefetchScalarGridSpec(
            num_scalar_prefetch=0,
            grid=(n_rows // block_rows,),
            in_specs=[
                pl.BlockSpec((block_rows, H), lambda i: (i, 0)),   # x row tile
                pl.BlockSpec((H, H), full, **w_kwargs),            # W1
                pl.BlockSpec((1, H), full, **w_kwargs),            # b1
                pl.BlockSpec((1, H), full, **w_kwargs),            # LN gamma
                pl.BlockSpec((1, H), full, **w_kwargs),            # LN beta
                pl.BlockSpec((H, C_pad), full, **w_kwargs),        # W2 (lane-padded)
                pl.BlockSpec((1, C_pad), full, **w_kwargs),        # b2 (lane-padded)
            ],
            out_specs=pl.BlockSpec((block_rows, C_pad), lambda i: (i, 0)),
        ),
        compiler_params=pltpu.CompilerParams(
            dimension_semantics=("parallel",),
            vmem_limit_bytes=vmem_limit,
        ),
    )


def bert_vm_prediction_head(x, w1, b1, gamma, beta, w2, b2, *,
                            block_rows=512, use_bf16=True):
    """x: [B, S, H]; w1: [H, H] (in,out); w2: [H, C] (in,out). Returns [B, S, C]."""
    B, S, H = x.shape
    C = w2.shape[1]
    N = B * S
    out_dtype = x.dtype

    # Big MXU-filling row tile, clamped for small inputs; pad rows to a multiple.
    tm = max(8, min(int(block_rows), _round_up(N, 8)))
    N_pad = _round_up(N, tm)
    # Lane-dense output: pad contrastive dim to a multiple of 128 with zeros.
    C_pad = _round_up(C, 128)

    in_dtype = jnp.bfloat16 if use_bf16 else jnp.float32
    x2d = x.reshape(N, H).astype(in_dtype)
    if N_pad != N:
        x2d = jnp.pad(x2d, ((0, N_pad - N), (0, 0)))
    w1c = w1.astype(in_dtype)
    w2c = jnp.pad(w2, ((0, 0), (0, C_pad - C))).astype(in_dtype)
    b1_2d = b1.reshape(1, H).astype(jnp.float32)
    g_2d = gamma.reshape(1, H).astype(jnp.float32)
    beta_2d = beta.reshape(1, H).astype(jnp.float32)
    b2_2d = jnp.pad(b2, (0, C_pad - C)).reshape(1, C_pad).astype(jnp.float32)

    # VMEM sizing (only relevant for big H / tm; capped at 64 MiB for v7x).
    w_bytes = jnp.dtype(in_dtype).itemsize
    o_bytes = jnp.dtype(out_dtype).itemsize
    est = (2 * tm * H * w_bytes                  # x double buffer
           + 2 * tm * C_pad * o_bytes            # out double buffer
           + 2 * (H * H + H * C_pad) * w_bytes   # weights (<= 2 buffers)
           + 8 * tm * (H + C_pad) * 4)           # f32 intermediates headroom
    vmem_limit = None
    if est > (16 << 20):
        vmem_limit = min(_round_up(int(est * 1.25), 1 << 20), 64 << 20)

    args = (x2d, w1c, b1_2d, g_2d, beta_2d, w2c, b2_2d)
    try:
        call = _build_call(N_pad, H, C_pad, tm, out_dtype, True, vmem_limit)
        out2d = call(*args)
    except Exception:
        # Fallback if single-buffered constant blocks (pl.Buffered(1)) are
        # not supported by this jax version: use default double buffering.
        call = _build_call(N_pad, H, C_pad, tm, out_dtype, False, vmem_limit)
        out2d = call(*args)

    return out2d[:N, :C].reshape(B, S, C)


def _reference(x, w1, b1, gamma, beta, w2, b2):
    h = x.astype(jnp.float32) @ w1 + b1
    h = 0.5 * h * (1.0 + lax.erf(h / jnp.sqrt(2.0)))
    mean = h.mean(-1, keepdims=True)
    var = ((h - mean) ** 2).mean(-1, keepdims=True)
    h = (h - mean) / jnp.sqrt(var + LN_EPS) * gamma + beta
    y = h @ w2 + b2
    return y / jnp.sqrt((y ** 2).sum(-1, keepdims=True))


if __name__ == "__main__":
    # Small config: batch=2, seq=8, hidden=32, contrastive=16
    B, S, H, C = 2, 8, 32, 16

    key = jax.random.PRNGKey(0)
    kx, kw1, kb1, kw2, kb2, kg, kbt = jax.random.split(key, 7)

    x = jax.random.normal(kx, (B, S, H), dtype=jnp.float32)
    # nn.Linear stores (out, in); we pass transposed (in, out) to the kernel.
    w1 = jax.random.normal(kw1, (H, H), dtype=jnp.float32) * 0.05
    b1 = jax.random.normal(kb1, (H,), dtype=jnp.float32) * 0.05
    gamma = 1.0 + 0.1 * jax.random.normal(kg, (H,), dtype=jnp.float32)
    beta = 0.1 * jax.random.normal(kbt, (H,), dtype=jnp.float32)
    w2 = jax.random.normal(kw2, (H, C), dtype=jnp.float32) * 0.05
    b2 = jax.random.normal(kb2, (C,), dtype=jnp.float32) * 0.05

    out = bert_vm_prediction_head(x, w1, b1, gamma, beta, w2, b2)
    out = jax.block_until_ready(out)

    ref = _reference(x, w1, b1, gamma, beta, w2, b2)
    assert out.shape == (B, S, C), out.shape
    # bf16 MXU operands vs. an all-f32 reference -> relaxed tolerance (expected).
    err = float(jnp.max(jnp.abs(out - ref)))
    assert err < 2e-2, err
    print("KERNEL_OK")
</pallas_src>

<mosaic_0001>
module attributes {stable_mosaic.version = 11 : i64} {
  func.func @_head_kernel(%arg0: i32, %arg1: memref<16x32xbf16, #tpu.memory_space<vmem>>, %arg2: memref<32x32xbf16, #tpu.memory_space<vmem>>, %arg3: memref<1x32xf32, #tpu.memory_space<vmem>>, %arg4: memref<1x32xf32, #tpu.memory_space<vmem>>, %arg5: memref<1x32xf32, #tpu.memory_space<vmem>>, %arg6: memref<32x128xbf16, #tpu.memory_space<vmem>>, %arg7: memref<1x128xf32, #tpu.memory_space<vmem>>, %arg8: memref<16x128xf32, #tpu.memory_space<vmem>>) attributes {dimension_semantics = [#tpu.dimension_semantics<parallel>], iteration_bounds = array<i64: 1>, scalar_prefetch = 0 : i64, scratch_operands = 0 : i64, tpu.core_type = #tpu.core_type<tc>, window_params = [{transform_indices = @transform_0, window_bounds = array<i64: 16, 32>}, {pipeline_mode = #tpu.pipeline_mode<synchronous>, transform_indices = @transform_1, window_bounds = array<i64: 32, 32>}, {pipeline_mode = #tpu.pipeline_mode<synchronous>, transform_indices = @transform_2, window_bounds = array<i64: 1, 32>}, {pipeline_mode = #tpu.pipeline_mode<synchronous>, transform_indices = @transform_3, window_bounds = array<i64: 1, 32>}, {pipeline_mode = #tpu.pipeline_mode<synchronous>, transform_indices = @transform_4, window_bounds = array<i64: 1, 32>}, {pipeline_mode = #tpu.pipeline_mode<synchronous>, transform_indices = @transform_5, window_bounds = array<i64: 32, 128>}, {pipeline_mode = #tpu.pipeline_mode<synchronous>, transform_indices = @transform_6, window_bounds = array<i64: 1, 128>}, {transform_indices = @transform_7, window_bounds = array<i64: 16, 128>}]} {
    %c0 = arith.constant 0 : index
    %c0_0 = arith.constant 0 : index
    %0 = vector.load %arg1[%c0, %c0_0] : memref<16x32xbf16, #tpu.memory_space<vmem>>, vector<16x32xbf16>
    %c0_1 = arith.constant 0 : index
    %c0_2 = arith.constant 0 : index
    %1 = vector.load %arg2[%c0_1, %c0_2] : memref<32x32xbf16, #tpu.memory_space<vmem>>, vector<32x32xbf16>
    %cst = arith.constant dense<0.000000e+00> : vector<16x32xf32>
    %2 = tpu.matmul %0, %1, %cst {dimension_numbers = #tpu.dot_dimension_numbers<[1], [0], [0], [1], [0, 0, 1, 1], [], []>} : vector<16x32xbf16>, vector<32x32xbf16>, vector<16x32xf32> -> vector<16x32xf32>
    %c0_3 = arith.constant 0 : index
    %c0_4 = arith.constant 0 : index
    %3 = vector.load %arg3[%c0_3, %c0_4] : memref<1x32xf32, #tpu.memory_space<vmem>>, vector<1x32xf32>
    %4 = vector.broadcast %3 : vector<1x32xf32> to vector<16x32xf32>
    %5 = arith.addf %2, %4 : vector<16x32xf32>
    %cst_5 = arith.constant 5.000000e-01 : f32
    %6 = vector.broadcast %cst_5 : f32 to vector<16x32xf32>
    %7 = arith.mulf %6, %5 : vector<16x32xf32>
    %cst_6 = arith.constant 0.707106769 : f32
    %8 = vector.broadcast %cst_6 : f32 to vector<16x32xf32>
    %9 = arith.mulf %5, %8 : vector<16x32xf32>
    %10 = math.erf %9 : vector<16x32xf32>
    %cst_7 = arith.constant 1.000000e+00 : f32
    %11 = vector.broadcast %cst_7 : f32 to vector<16x32xf32>
    %12 = arith.addf %11, %10 : vector<16x32xf32>
    %13 = arith.mulf %7, %12 : vector<16x32xf32>
    %cst_8 = arith.constant dense<0.000000e+00> : vector<16xf32>
    %14 = vector.multi_reduction <add>, %13, %cst_8 [1] : vector<16x32xf32> to vector<16xf32>
    %15 = vector.shape_cast %14 : vector<16xf32> to vector<16x1xf32>
    %16 = arith.mulf %13, %13 : vector<16x32xf32>
    %cst_9 = arith.constant dense<0.000000e+00> : vector<16xf32>
    %17 = vector.multi_reduction <add>, %16, %cst_9 [1] : vector<16x32xf32> to vector<16xf32>
    %18 = vector.shape_cast %17 : vector<16xf32> to vector<16x1xf32>
    %cst_10 = arith.constant 3.125000e-02 : f32
    %19 = vector.broadcast %cst_10 : f32 to vector<16x1xf32>
    %20 = arith.mulf %15, %19 : vector<16x1xf32>
    %cst_11 = arith.constant 3.125000e-02 : f32
    %21 = vector.broadcast %cst_11 : f32 to vector<16x1xf32>
    %22 = arith.mulf %18, %21 : vector<16x1xf32>
    %23 = arith.mulf %20, %20 : vector<16x1xf32>
    %24 = arith.subf %22, %23 : vector<16x1xf32>
    %cst_12 = arith.constant 0.000000e+00 : f32
    %25 = vector.broadcast %cst_12 : f32 to vector<16x1xf32>
    %26 = arith.maximumf %24, %25 : vector<16x1xf32>
    %27 = vector.broadcast %20 : vector<16x1xf32> to vector<16x32xf32>
    %28 = arith.subf %13, %27 : vector<16x32xf32>
    %cst_13 = arith.constant 9.99999996E-13 : f32
    %29 = vector.broadcast %cst_13 : f32 to vector<16x1xf32>
    %30 = arith.addf %26, %29 : vector<16x1xf32>
    %31 = math.rsqrt %30 : vector<16x1xf32>
    %32 = vector.broadcast %31 : vector<16x1xf32> to vector<16x32xf32>
    %33 = arith.mulf %28, %32 : vector<16x32xf32>
    %c0_14 = arith.constant 0 : index
    %c0_15 = arith.constant 0 : index
    %34 = vector.load %arg4[%c0_14, %c0_15] : memref<1x32xf32, #tpu.memory_space<vmem>>, vector<1x32xf32>
    %35 = vector.broadcast %34 : vector<1x32xf32> to vector<16x32xf32>
    %36 = arith.mulf %33, %35 : vector<16x32xf32>
    %c0_16 = arith.constant 0 : index
    %c0_17 = arith.constant 0 : index
    %37 = vector.load %arg5[%c0_16, %c0_17] : memref<1x32xf32, #tpu.memory_space<vmem>>, vector<1x32xf32>
    %38 = vector.broadcast %37 : vector<1x32xf32> to vector<16x32xf32>
    %39 = arith.addf %36, %38 : vector<16x32xf32>
    %40 = arith.truncf %39 : vector<16x32xf32> to vector<16x32xbf16>
    %c0_18 = arith.constant 0 : index
    %c0_19 = arith.constant 0 : index
    %41 = vector.load %arg6[%c0_18, %c0_19] : memref<32x128xbf16, #tpu.memory_space<vmem>>, vector<32x128xbf16>
    %cst_20 = arith.constant dense<0.000000e+00> : vector<16x128xf32>
    %42 = tpu.matmul %40, %41, %cst_20 {dimension_numbers = #tpu.dot_dimension_numbers<[1], [0], [0], [1], [0, 0, 1, 1], [], []>} : vector<16x32xbf16>, vector<32x128xbf16>, vector<16x128xf32> -> vector<16x128xf32>
    %c0_21 = arith.constant 0 : index
    %c0_22 = arith.constant 0 : index
    %43 = vector.load %arg7[%c0_21, %c0_22] : memref<1x128xf32, #tpu.memory_space<vmem>>, vector<1x128xf32>
    %44 = vector.broadcast %43 : vector<1x128xf32> to vector<16x128xf32>
    %45 = arith.addf %42, %44 : vector<16x128xf32>
    %46 = arith.mulf %45, %45 : vector<16x128xf32>
    %cst_23 = arith.constant dense<0.000000e+00> : vector<16xf32>
    %47 = vector.multi_reduction <add>, %46, %cst_23 [1] : vector<16x128xf32> to vector<16xf32>
    %48 = vector.shape_cast %47 : vector<16xf32> to vector<16x1xf32>
    %49 = math.rsqrt %48 : vector<16x1xf32>
    %50 = vector.broadcast %49 : vector<16x1xf32> to vector<16x128xf32>
    %51 = arith.mulf %45, %50 : vector<16x128xf32>
    %c0_24 = arith.constant 0 : index
    %c0_25 = arith.constant 0 : index
    %52 = vector.load %arg8[%c0_24, %c0_25] : memref<16x128xf32, #tpu.memory_space<vmem>>, vector<16x128xf32>
    tpu.vector_store %arg8[%c0_24, %c0_25], %51 {strides = array<i32>} : memref<16x128xf32, #tpu.memory_space<vmem>>, vector<16x128xf32>,
    return
  }
  func.func @transform_0(%arg0: i32) -> (i32, i32) {
    %c0_i32 = arith.constant 0 : i32
    %c0_i32_0 = arith.constant 0 : i32
    return %arg0, %c0_i32 : i32, i32
  }
  func.func @transform_1(%arg0: i32) -> (i32, i32) {
    %c0_i32 = arith.constant 0 : i32
    %c0_i32_0 = arith.constant 0 : i32
    %c0_i32_1 = arith.constant 0 : i32
    return %c0_i32, %c0_i32_0 : i32, i32
  }
  func.func @transform_2(%arg0: i32) -> (i32, i32) {
    %c0_i32 = arith.constant 0 : i32
    %c0_i32_0 = arith.constant 0 : i32
    %c0_i32_1 = arith.constant 0 : i32
    return %c0_i32, %c0_i32_0 : i32, i32
  }
  func.func @transform_3(%arg0: i32) -> (i32, i32) {
    %c0_i32 = arith.constant 0 : i32
    %c0_i32_0 = arith.constant 0 : i32
    %c0_i32_1 = arith.constant 0 : i32
    return %c0_i32, %c0_i32_0 : i32, i32
  }
  func.func @transform_4(%arg0: i32) -> (i32, i32) {
    %c0_i32 = arith.constant 0 : i32
    %c0_i32_0 = arith.constant 0 : i32
    %c0_i32_1 = arith.constant 0 : i32
    return %c0_i32, %c0_i32_0 : i32, i32
  }
  func.func @transform_5(%arg0: i32) -> (i32, i32) {
    %c0_i32 = arith.constant 0 : i32
    %c0_i32_0 = arith.constant 0 : i32
    %c0_i32_1 = arith.constant 0 : i32
    return %c0_i32, %c0_i32_0 : i32, i32
  }
  func.func @transform_6(%arg0: i32) -> (i32, i32) {
    %c0_i32 = arith.constant 0 : i32
    %c0_i32_0 = arith.constant 0 : i32
    %c0_i32_1 = arith.constant 0 : i32
    return %c0_i32, %c0_i32_0 : i32, i32
  }
  func.func @transform_7(%arg0: i32) -> (i32, i32) {
    %c0_i32 = arith.constant 0 : i32
    %c0_i32_0 = arith.constant 0 : i32
    return %arg0, %c0_i32 : i32, i32
  }
}

module attributes {stable_mosaic.version = 11 : i64} {
  func.func @_head_kernel(%arg0: i32, %arg1: memref<16x32xbf16, #tpu.memory_space<vmem>>, %arg2: memref<32x32xbf16, #tpu.memory_space<vmem>>, %arg3: memref<1x32xf32, #tpu.memory_space<vmem>>, %arg4: memref<1x32xf32, #tpu.memory_space<vmem>>, %arg5: memref<1x32xf32, #tpu.memory_space<vmem>>, %arg6: memref<32x128xbf16, #tpu.memory_space<vmem>>, %arg7: memref<1x128xf32, #tpu.memory_space<vmem>>, %arg8: memref<16x128xf32, #tpu.memory_space<vmem>>) attributes {dimension_semantics = [#tpu.dimension_semantics<parallel>], iteration_bounds = array<i64: 1>, scalar_prefetch = 0 : i64, scratch_operands = 0 : i64, tpu.core_type = #tpu.core_type<tc>, window_params = [{transform_indices = @transform_0, window_bounds = array<i64: 16, 32>}, {pipeline_mode = #tpu.pipeline_mode<synchronous>, transform_indices = @transform_1, window_bounds = array<i64: 32, 32>}, {pipeline_mode = #tpu.pipeline_mode<synchronous>, transform_indices = @transform_2, window_bounds = array<i64: 1, 32>}, {pipeline_mode = #tpu.pipeline_mode<synchronous>, transform_indices = @transform_3, window_bounds = array<i64: 1, 32>}, {pipeline_mode = #tpu.pipeline_mode<synchronous>, transform_indices = @transform_4, window_bounds = array<i64: 1, 32>}, {pipeline_mode = #tpu.pipeline_mode<synchronous>, transform_indices = @transform_5, window_bounds = array<i64: 32, 128>}, {pipeline_mode = #tpu.pipeline_mode<synchronous>, transform_indices = @transform_6, window_bounds = array<i64: 1, 128>}, {transform_indices = @transform_7, window_bounds = array<i64: 16, 128>}]} {
    %c0 = arith.constant 0 : index
    %c0_0 = arith.constant 0 : index
    %0 = vector.load %arg1[%c0, %c0_0] : memref<16x32xbf16, #tpu.memory_space<vmem>>, vector<16x32xbf16>
    %c0_1 = arith.constant 0 : index
    %c0_2 = arith.constant 0 : index
    %1 = vector.load %arg2[%c0_1, %c0_2] : memref<32x32xbf16, #tpu.memory_space<vmem>>, vector<32x32xbf16>
    %cst = arith.constant dense<0.000000e+00> : vector<16x32xf32>
    %2 = tpu.matmul %0, %1, %cst {dimension_numbers = #tpu.dot_dimension_numbers<[1], [0], [0], [1], [0, 0, 1, 1], [], []>} : vector<16x32xbf16>, vector<32x32xbf16>, vector<16x32xf32> -> vector<16x32xf32>
    %c0_3 = arith.constant 0 : index
    %c0_4 = arith.constant 0 : index
    %3 = vector.load %arg3[%c0_3, %c0_4] : memref<1x32xf32, #tpu.memory_space<vmem>>, vector<1x32xf32>
    %4 = vector.broadcast %3 : vector<1x32xf32> to vector<16x32xf32>
    %5 = arith.addf %2, %4 : vector<16x32xf32>
    %cst_5 = arith.constant 5.000000e-01 : f32
    %6 = vector.broadcast %cst_5 : f32 to vector<16x32xf32>
    %7 = arith.mulf %6, %5 : vector<16x32xf32>
    %cst_6 = arith.constant 0.707106769 : f32
    %8 = vector.broadcast %cst_6 : f32 to vector<16x32xf32>
    %9 = arith.mulf %5, %8 : vector<16x32xf32>
    %10 = math.erf %9 : vector<16x32xf32>
    %cst_7 = arith.constant 1.000000e+00 : f32
    %11 = vector.broadcast %cst_7 : f32 to vector<16x32xf32>
    %12 = arith.addf %11, %10 : vector<16x32xf32>
    %13 = arith.mulf %7, %12 : vector<16x32xf32>
    %cst_8 = arith.constant dense<0.000000e+00> : vector<16xf32>
    %14 = vector.multi_reduction <add>, %13, %cst_8 [1] : vector<16x32xf32> to vector<16xf32>
    %15 = vector.shape_cast %14 : vector<16xf32> to vector<16x1xf32>
    %16 = arith.mulf %13, %13 : vector<16x32xf32>
    %cst_9 = arith.constant dense<0.000000e+00> : vector<16xf32>
    %17 = vector.multi_reduction <add>, %16, %cst_9 [1] : vector<16x32xf32> to vector<16xf32>
    %18 = vector.shape_cast %17 : vector<16xf32> to vector<16x1xf32>
    %cst_10 = arith.constant 3.125000e-02 : f32
    %19 = vector.broadcast %cst_10 : f32 to vector<16x1xf32>
    %20 = arith.mulf %15, %19 : vector<16x1xf32>
    %cst_11 = arith.constant 3.125000e-02 : f32
    %21 = vector.broadcast %cst_11 : f32 to vector<16x1xf32>
    %22 = arith.mulf %18, %21 : vector<16x1xf32>
    %23 = arith.mulf %20, %20 : vector<16x1xf32>
    %24 = arith.subf %22, %23 : vector<16x1xf32>
    %cst_12 = arith.constant 0.000000e+00 : f32
    %25 = vector.broadcast %cst_12 : f32 to vector<16x1xf32>
    %26 = arith.maximumf %24, %25 : vector<16x1xf32>
    %27 = vector.broadcast %20 : vector<16x1xf32> to vector<16x32xf32>
    %28 = arith.subf %13, %27 : vector<16x32xf32>
    %cst_13 = arith.constant 9.99999996E-13 : f32
    %29 = vector.broadcast %cst_13 : f32 to vector<16x1xf32>
    %30 = arith.addf %26, %29 : vector<16x1xf32>
    %31 = math.rsqrt %30 : vector<16x1xf32>
    %32 = vector.broadcast %31 : vector<16x1xf32> to vector<16x32xf32>
    %33 = arith.mulf %28, %32 : vector<16x32xf32>
    %c0_14 = arith.constant 0 : index
    %c0_15 = arith.constant 0 : index
    %34 = vector.load %arg4[%c0_14, %c0_15] : memref<1x32xf32, #tpu.memory_space<vmem>>, vector<1x32xf32>
    %35 = vector.broadcast %34 : vector<1x32xf32> to vector<16x32xf32>
    %36 = arith.mulf %33, %35 : vector<16x32xf32>
    %c0_16 = arith.constant 0 : index
    %c0_17 = arith.constant 0 : index
    %37 = vector.load %arg5[%c0_16, %c0_17] : memref<1x32xf32, #tpu.memory_space<vmem>>, vector<1x32xf32>
    %38 = vector.broadcast %37 : vector<1x32xf32> to vector<16x32xf32>
    %39 = arith.addf %36, %38 : vector<16x32xf32>
    %40 = arith.truncf %39 : vector<16x32xf32> to vector<16x32xbf16>
    %c0_18 = arith.constant 0 : index
    %c0_19 = arith.constant 0 : index
    %41 = vector.load %arg6[%c0_18, %c0_19] : memref<32x128xbf16, #tpu.memory_space<vmem>>, vector<32x128xbf16>
    %cst_20 = arith.constant dense<0.000000e+00> : vector<16x128xf32>
    %42 = tpu.matmul %40, %41, %cst_20 {dimension_numbers = #tpu.dot_dimension_numbers<[1], [0], [0], [1], [0, 0, 1, 1], [], []>} : vector<16x32xbf16>, vector<32x128xbf16>, vector<16x128xf32> -> vector<16x128xf32>
    %c0_21 = arith.constant 0 : index
    %c0_22 = arith.constant 0 : index
    %43 = vector.load %arg7[%c0_21, %c0_22] : memref<1x128xf32, #tpu.memory_space<vmem>>, vector<1x128xf32>
    %44 = vector.broadcast %43 : vector<1x128xf32> to vector<16x128xf32>
    %45 = arith.addf %42, %44 : vector<16x128xf32>
    %46 = arith.mulf %45, %45 : vector<16x128xf32>
    %cst_23 = arith.constant dense<0.000000e+00> : vector<16xf32>
    %47 = vector.multi_reduction <add>, %46, %cst_23 [1] : vector<16x128xf32> to vector<16xf32>
    %48 = vector.shape_cast %47 : vector<16xf32> to vector<16x1xf32>
    %49 = math.rsqrt %48 : vector<16x1xf32>
    %50 = vector.broadcast %49 : vector<16x1xf32> to vector<16x128xf32>
    %51 = arith.mulf %45, %50 : vector<16x128xf32>
    %c0_24 = arith.constant 0 : index
    %c0_25 = arith.constant 0 : index
    %52 = vector.load %arg8[%c0_24, %c0_25] : memref<16x128xf32, #tpu.memory_space<vmem>>, vector<16x128xf32>
    tpu.vector_store %arg8[%c0_24, %c0_25], %51 {strides = array<i32>} : memref<16x128xf32, #tpu.memory_space<vmem>>, vector<16x128xf32>,
    return
  }
  func.func @transform_0(%arg0: i32) -> (i32, i32) {
    %c0_i32 = arith.constant 0 : i32
    %c0_i32_0 = arith.constant 0 : i32
    return %arg0, %c0_i32 : i32, i32
  }
  func.func @transform_1(%arg0: i32) -> (i32, i32) {
    %c0_i32 = arith.constant 0 : i32
    %c0_i32_0 = arith.constant 0 : i32
    %c0_i32_1 = arith.constant 0 : i32
    return %c0_i32, %c0_i32_0 : i32, i32
  }
  func.func @transform_2(%arg0: i32) -> (i32, i32) {
    %c0_i32 = arith.constant 0 : i32
    %c0_i32_0 = arith.constant 0 : i32
    %c0_i32_1 = arith.constant 0 : i32
    return %c0_i32, %c0_i32_0 : i32, i32
  }
  func.func @transform_3(%arg0: i32) -> (i32, i32) {
    %c0_i32 = arith.constant 0 : i32
    %c0_i32_0 = arith.constant 0 : i32
    %c0_i32_1 = arith.constant 0 : i32
    return %c0_i32, %c0_i32_0 : i32, i32
  }
  func.func @transform_4(%arg0: i32) -> (i32, i32) {
    %c0_i32 = arith.constant 0 : i32
    %c0_i32_0 = arith.constant 0 : i32
    %c0_i32_1 = arith.constant 0 : i32
    return %c0_i32, %c0_i32_0 : i32, i32
  }
  func.func @transform_5(%arg0: i32) -> (i32, i32) {
    %c0_i32 = arith.constant 0 : i32
    %c0_i32_0 = arith.constant 0 : i32
    %c0_i32_1 = arith.constant 0 : i32
    return %c0_i32, %c0_i32_0 : i32, i32
  }
  func.func @transform_6(%arg0: i32) -> (i32, i32) {
    %c0_i32 = arith.constant 0 : i32
    %c0_i32_0 = arith.constant 0 : i32
    %c0_i32_1 = arith.constant 0 : i32
    return %c0_i32, %c0_i32_0 : i32, i32
  }
  func.func @transform_7(%arg0: i32) -> (i32, i32) {
    %c0_i32 = arith.constant 0 : i32
    %c0_i32_0 = arith.constant 0 : i32
    return %arg0, %c0_i32 : i32, i32
  }
}

</mosaic_0001>

<llo_original>
// kernel: tpu_custom_call.1
$region0: #{tpu_custom_call.1}
  #allocation0 [shape = 'u32[]', space=smem, size = 0x4, offset = 0x4, fixed_abs, tag = 'smem constant byte address 0x4 - core index']
  #allocation1 [shape = 'u32[144,128]{1,0:T(1,128)}', space=vmem, size = 0x12000, scoped, tag = 'internal scratch']
  %s0 = inlined_call_operand.hbm [shape: bf16[16,32], index: 0, kind: input, shape index: {}]
  %s1 = inlined_call_operand.hbm [shape: bf16[32,32], index: 1, kind: input, shape index: {}]
  %s2 = inlined_call_operand.vmem [shape: f32[1,32], index: 2, kind: input, shape index: {}]
  %s3 = inlined_call_operand.vmem [shape: f32[1,32], index: 3, kind: input, shape index: {}]
  %s4 = inlined_call_operand.vmem [shape: f32[1,32], index: 4, kind: input, shape index: {}]
  %s5 = inlined_call_operand.hbm [shape: bf16[32,128], index: 5, kind: input, shape index: {}]
  %s6 = inlined_call_operand.vmem [shape: f32[1,128], index: 6, kind: input, shape index: {}]
  %s7 = inlined_call_operand.hbm [shape: f32[16,128], index: 7, kind: output, shape index: {}]
  %s8 = sld [smem:[#allocation0]]
  $region50: #{tpu_custom_call.1} parent=0
    _
  %s10 = ssub.s32 1, %s8
  %s11 = scalar_select 0, %s10, %s8
  $region1: #{tpu_custom_call.1} parent=0
    #allocation2 [shape = 'u8[4096]{0}', space=vmem, size = 0x1000, scoped, tag = 'input window, operand 0, single buffered']
    #allocation3 [shape = 's32[1]{0}', space=sflag, size = 0x4, scoped, tag = 'scoped memory for tpu_custom_call.1']
    #allocation4 [shape = 's32[1]{0}', space=sflag, size = 0x4, scoped, tag = 'scoped memory for tpu_custom_call.1']
    #allocation5 [shape = 'u8[8192]{0}', space=vmem, size = 0x2000, scoped, tag = 'input window, operand 1, single buffered']
    #allocation6 [shape = 's32[1]{0}', space=sflag, size = 0x4, scoped, tag = 'scoped memory for tpu_custom_call.1']
    #allocation7 [shape = 'u8[8192]{0}', space=vmem, size = 0x2000, scoped, tag = 'input window, operand 5, single buffered']
    #allocation8 [shape = 'u8[8192]{0}', space=vmem, size = 0x2000, scoped, tag = 'output window, operand 0, single buffered']
    %12 = vsyncpa [#allocation3], 0
    %13 = vsyncpa [#allocation6], 0
    %14 = vsyncpa [#allocation4], 0
    // Predicated region
    $region2: #{tpu_custom_call.1} parent=1 // pred_check
      _
    $region3: #{tpu_custom_call.1} parent=1 // pred_check_branch
      %16 = sbr.rel (0) target = $region5
    $region4: #{tpu_custom_call.1} parent=1 // pred_region
      %s18 = ssub.s32 128, 128
      %19 = vsyncadd [#allocation3], %s18
      %s20 = sshll.u32 [#allocation2], 4
      %s21 = int_to_ptr.vmem [resolvable:$true] %s20
      %26 = dma.hbm_to_vmem [thread:$0]  %s0, 128, %s21, [#allocation3], 64, 64, 4
    $region5: #{tpu_custom_call.1} parent=1 // pred_fallthru
      _
    // Predicated region
    $region6: #{tpu_custom_call.1} parent=1 // pred_check
      _
    $region7: #{tpu_custom_call.1} parent=1 // pred_check_branch
      %28 = sbr.rel (0) target = $region9
    $region8: #{tpu_custom_call.1} parent=1 // pred_region
      %s30 = ssub.s32 256, 256
      %31 = vsyncadd [#allocation6], %s30
      %s32 = sshll.u32 [#allocation5], 4
      %s33 = int_to_ptr.vmem [resolvable:$true] %s32
      %38 = dma.hbm_to_vmem [thread:$0]  %s1, 256, %s33, [#allocation6], 64, 64, 4
    $region9: #{tpu_custom_call.1} parent=1 // pred_fallthru
      _
    // Predicated region
    $region10: #{tpu_custom_call.1} parent=1 // pred_check
      _
    $region11: #{tpu_custom_call.1} parent=1 // pred_check_branch
      %40 = sbr.rel (0) target = $region13
    $region12: #{tpu_custom_call.1} parent=1 // pred_region
      _
    $region13: #{tpu_custom_call.1} parent=1 // pred_fallthru
      _
    // Predicated region
    $region14: #{tpu_custom_call.1} parent=1 // pred_check
      _
    $region15: #{tpu_custom_call.1} parent=1 // pred_check_branch
      %42 = sbr.rel (0) target = $region17
    $region16: #{tpu_custom_call.1} parent=1 // pred_region
      _
    $region17: #{tpu_custom_call.1} parent=1 // pred_fallthru
      _
    // Predicated region
    $region18: #{tpu_custom_call.1} parent=1 // pred_check
      _
    $region19: #{tpu_custom_call.1} parent=1 // pred_check_branch
      %44 = sbr.rel (0) target = $region21
    $region20: #{tpu_custom_call.1} parent=1 // pred_region
      _
    $region21: #{tpu_custom_call.1} parent=1 // pred_fallthru
      _
    // Predicated region
    $region22: #{tpu_custom_call.1} parent=1 // pred_check
      _
    $region23: #{tpu_custom_call.1} parent=1 // pred_check_branch
      %46 = sbr.rel (0) target = $region25
    $region24: #{tpu_custom_call.1} parent=1 // pred_region
      %s48 = ssub.s32 256, 256
      %49 = vsyncadd [#allocation6], %s48
      %s50 = sshll.u32 [#allocation7], 4
      %s51 = int_to_ptr.vmem [resolvable:$true] %s50
      %56 = dma.hbm_to_vmem [thread:$0]  %s5, 256, %s51, [#allocation6], 64, 64, 4
    $region25: #{tpu_custom_call.1} parent=1 // pred_fallthru
      _
    // Predicated region
    $region26: #{tpu_custom_call.1} parent=1 // pred_check
      _
    $region27: #{tpu_custom_call.1} parent=1 // pred_check_branch
      %58 = sbr.rel (0) target = $region29
    $region28: #{tpu_custom_call.1} parent=1 // pred_region
      _
    $region29: #{tpu_custom_call.1} parent=1 // pred_fallthru
      _
    // Predicated region
    $region30: #{tpu_custom_call.1} parent=1 // pred_check
      _
    $region31: #{tpu_custom_call.1} parent=1 // pred_check_branch
      %60 = sbr.rel (0) target = $region33
    $region32: #{tpu_custom_call.1} parent=1 // pred_region
      %61 = dma.done [#allocation3], 128
    $region33: #{tpu_custom_call.1} parent=1 // pred_fallthru
      _
    // Predicated region
    $region34: #{tpu_custom_call.1} parent=1 // pred_check
      _
    $region35: #{tpu_custom_call.1} parent=1 // pred_check_branch
      %63 = sbr.rel (0) target = $region37
    $region36: #{tpu_custom_call.1} parent=1 // pred_region
      %64 = dma.done [#allocation6], 256
    $region37: #{tpu_custom_call.1} parent=1 // pred_fallthru
      _
    // Predicated region
    $region38: #{tpu_custom_call.1} parent=1 // pred_check
      _
    $region39: #{tpu_custom_call.1} parent=1 // pred_check_branch
      %66 = sbr.rel (0) target = $region41
    $region40: #{tpu_custom_call.1} parent=1 // pred_region
      %67 = dma.done [#allocation6], 256
    $region41: #{tpu_custom_call.1} parent=1 // pred_fallthru
      _
    %v69 = vld [vmem:[#allocation2] sm:$0xf]
    %v70 = vld [vmem:[#allocation2 + $0x4] sm:$0xf]
    %v71 = vld [vmem:[#allocation5] sm:$0xf]
    %v72 = vld [vmem:[#allocation5 + $0x4] sm:$0xf]
    %v73 = vld [vmem:[#allocation5 + $0x8] sm:$0xf]
    %v74 = vld [vmem:[#allocation5 + $0xc] sm:$0xf]
    %v75 = vld [vmem:[%s2] sm:$0x1]
    %v77 = vlaneseq
    %v78 = vshrl.u32 %v77, 7
    %v79 = vsub.s32 0, %v78
    %v80 = vrot.slane %v75, %v79
    %v84 = vunpack.c.l.b16 %v69
    %v85 = vunpack.c.l.b16 %v70
    %v86 = vpack.c.b16 %v85, %v84
    %v91 = vunpack.c.l.b16 %v71
    %v92 = vunpack.c.l.b16 %v72
    %v93 = vunpack.c.l.b16 %v73
    %v94 = vunpack.c.l.b16 %v74
    %v95 = vpack.c.b16 %v92, %v91
    %v96 = vpack.c.b16 %v94, %v93
    %vm99 = vcmask 261120
    %v101 = vsel %vm99, %v86, 0
    %103 = vmatprep.subr.bf16.mxu0 0
    %104 = vmatpush1.bf16.msra.mxu0 0
    %105 = vmatprep.subr.bf16.mxu0 0
    %106 = vmatpush1.bf16.msra.mxu0 0
    %107 = vmatprep.subr.bf16.mxu0 0
    %108 = vmatpush1.bf16.msra.mxu0 0
    %109 = vmatprep.subr.bf16.mxu0 0
    %110 = vmatpush1.bf16.msra.mxu0 0
    %111 = vmatprep.subr.bf16.mxu0 0
    %112 = vmatpush1.bf16.msra.mxu0 0
    %113 = vmatprep.subr.bf16.mxu0 0
    %114 = vmatpush1.bf16.msra.mxu0 0
    %115 = vmatprep.subr.bf16.mxu0 0
    %116 = vmatpush1.bf16.msra.mxu0 %v96
    %117 = vmatprep.subr.bf16.mxu0 0
    %118 = vmatpush1.bf16.msra.mxu0 %v95
    %119 = vmatprep.subr.bf16.mxu0 0
    %120 = vmatpush2.bf16.msra.mxu0 0
    %121 = vmatprep.subr.bf16.mxu0 0
    %122 = vmatpush2.bf16.msra.mxu0 0
    %123 = vmatprep.subr.bf16.mxu0 0
    %124 = vmatpush2.bf16.msra.mxu0 0
    %125 = vmatprep.subr.bf16.mxu0 0
    %126 = vmatpush2.bf16.msra.mxu0 0
    %127 = vmatprep.subr.bf16.mxu0 0
    %128 = vmatpush2.bf16.msra.mxu0 0
    %129 = vmatprep.subr.bf16.mxu0 0
    %130 = vmatpush2.bf16.msra.mxu0 0
    %131 = vmatprep.subr.bf16.mxu0 0
    %132 = vmatpush2.bf16.msra.mxu0 0
    %133 = vmatprep.subr.bf16.mxu0 0
    %134 = vmatpush2.bf16.msra.mxu0 0
    %135 = vmatprep.mubr.bf16.mxu0 0
    %136 = vmatmul.mubr.bf16.gmra.mxu0 %v101
    %v137 = vpop.f32.mrf.mxu0
    %v138 = vadd.f32 %v80, %v137
    %v139 = vpop.f32.mrf.mxu0
    %v140 = vpop.f32.mrf.mxu0
    %v141 = vadd.f32 %v80, %v140
    %v142 = vpop.f32.mrf.mxu0
    %143 = vdwg.mxu0
    %v144 = vmul.f32 %v138, 0.5
    %v145 = vmul.f32 %v141, 0.5
    %v146 = vmul.f32 %v138, 0.70710677
    %v147 = vmul.f32 %v141, 0.70710677
    %v148 = verf.f32.pop %v146
    %v149 = verf.f32.pop %v147
    %v150 = vadd.f32 %v148, 1.0
    %v151 = vadd.f32 %v149, 1.0
    %v152 = vmul.f32 %v144, %v150
    %v153 = vmul.f32 %v145, %v151
    %v154 = vsel %vm99, %v152, 0.0
    %155 = vadd.xlane.f32.xlu0 %v154
    %v156 = vpop.xlane.xlu0 %155
    %v157 = vsel %vm99, %v153, 0.0
    %158 = vadd.xlane.f32.xlu0 %v157
    %v159 = vpop.xlane.xlu0 %158
    %v160 = vmul.f32 %v152, %v152
    %v161 = vmul.f32 %v153, %v153
    %v162 = vsel %vm99, %v160, 0.0
    %163 = vadd.xlane.f32.xlu0 %v162
    %v164 = vpop.xlane.xlu0 %163
    %v165 = vsel %vm99, %v161, 0.0
    %166 = vadd.xlane.f32.xlu0 %v165
    %v167 = vpop.xlane.xlu0 %166
    %v168 = vmul.f32 %v156, 0.03125
    %v169 = vmul.f32 %v159, 0.03125
    %v170 = vmul.f32 %v164, 0.03125
    %v171 = vmul.f32 %v167, 0.03125
    %v172 = vmul.f32 %v168, %v168
    %v173 = vmul.f32 %v169, %v169
    %v174 = vsub.f32 %v170, %v172
    %v175 = vsub.f32 %v171, %v173
    %v176 = vmax.f32 %v174, 0.0
    %v177 = vmax.f32 %v175, 0.0
    %v178 = vsub.f32 %v152, %v168
    %v179 = vsub.f32 %v153, %v169
    %v180 = vadd.f32 %v176, 1e-12
    %v181 = vadd.f32 %v177, 1e-12
    %v182 = vrsqrt.pop %v180
    %v183 = vrsqrt.pop %v181
    %v184 = vmul.f32 %v178, %v182
    %v185 = vmul.f32 %v179, %v183
    %v186 = vld [vmem:[%s3] sm:$0x1]
    %v188 = vlaneseq
    %v189 = vshrl.u32 %v188, 7
    %v190 = vsub.s32 0, %v189
    %v191 = vrot.slane %v186, %v190
    %v193 = vmul.f32 %v184, %v191
    %v194 = vmul.f32 %v185, %v191
    %v195 = vld [vmem:[%s4] sm:$0x1]
    %v197 = vlaneseq
    %v198 = vshrl.u32 %v197, 7
    %v199 = vsub.s32 0, %v198
    %v200 = vrot.slane %v195, %v199
    %v202 = vadd.f32 %v193, %v200
    %v203 = vadd.f32 %v194, %v200
    %v204 = vpack.c.bf16 %v203, %v202
    %v205 = vld [vmem:[#allocation7] sm:$0xf]
    %v206 = vld [vmem:[#allocation7 + $0x4] sm:$0xf]
    %v207 = vld [vmem:[#allocation7 + $0x8] sm:$0xf]
    %v208 = vld [vmem:[#allocation7 + $0xc] sm:$0xf]
    %v209 = vld [vmem:[%s6] sm:$0x1]
    %v211 = vlaneseq
    %v212 = vshrl.u32 %v211, 7
    %v213 = vsub.s32 0, %v212
    %v214 = vrot.slane %v209, %v213
    %v220 = vunpack.c.l.b16 %v205
    %v221 = vunpack.c.l.b16 %v206
    %v222 = vunpack.c.l.b16 %v207
    %v223 = vunpack.c.l.b16 %v208
    %v224 = vpack.c.b16 %v221, %v220
    %v225 = vpack.c.b16 %v223, %v222
    %v229 = vsel %vm99, %v204, 0
    %231 = vmatprep.subr.bf16.mxu0 0
    %232 = vmatpush1.bf16.msra.mxu0 0
    %233 = vmatprep.subr.bf16.mxu0 0
    %234 = vmatpush1.bf16.msra.mxu0 0
    %235 = vmatprep.subr.bf16.mxu0 0
    %236 = vmatpush1.bf16.msra.mxu0 0
    %237 = vmatprep.subr.bf16.mxu0 0
    %238 = vmatpush1.bf16.msra.mxu0 0
    %239 = vmatprep.subr.bf16.mxu0 0
    %240 = vmatpush1.bf16.msra.mxu0 0
    %241 = vmatprep.subr.bf16.mxu0 0
    %242 = vmatpush1.bf16.msra.mxu0 0
    %243 = vmatprep.subr.bf16.mxu0 0
    %244 = vmatpush1.bf16.msra.mxu0 %v225
    %245 = vmatprep.subr.bf16.mxu0 0
    %246 = vmatpush1.bf16.msra.mxu0 %v224
    %247 = vmatprep.subr.bf16.mxu0 0
    %248 = vmatpush2.bf16.msra.mxu0 0
    %249 = vmatprep.subr.bf16.mxu0 0
    %250 = vmatpush2.bf16.msra.mxu0 0
    %251 = vmatprep.subr.bf16.mxu0 0
    %252 = vmatpush2.bf16.msra.mxu0 0
    %253 = vmatprep.subr.bf16.mxu0 0
    %254 = vmatpush2.bf16.msra.mxu0 0
    %255 = vmatprep.subr.bf16.mxu0 0
    %256 = vmatpush2.bf16.msra.mxu0 0
    %257 = vmatprep.subr.bf16.mxu0 0
    %258 = vmatpush2.bf16.msra.mxu0 0
    %259 = vmatprep.subr.bf16.mxu0 0
    %260 = vmatpush2.bf16.msra.mxu0 0
    %261 = vmatprep.subr.bf16.mxu0 0
    %262 = vmatpush2.bf16.msra.mxu0 0
    %263 = vmatprep.mubr.bf16.mxu0 0
    %264 = vmatmul.mubr.bf16.gmra.mxu0 %v229
    %v265 = vpop.f32.mrf.mxu0
    %v266 = vadd.f32 %v214, %v265
    %v267 = vpop.f32.mrf.mxu0
    %v268 = vpop.f32.mrf.mxu0
    %v269 = vadd.f32 %v214, %v268
    %v270 = vpop.f32.mrf.mxu0
    %271 = vdwg.mxu0
    %v272 = vmul.f32 %v266, %v266
    %v273 = vmul.f32 %v269, %v269
    %274 = vadd.xlane.f32.xlu0 %v272
    %v275 = vpop.xlane.xlu0 %274
    %276 = vadd.xlane.f32.xlu0 %v273
    %v277 = vpop.xlane.xlu0 %276
    %v278 = vrsqrt.pop %v275
    %v279 = vrsqrt.pop %v277
    %v280 = vmul.f32 %v266, %v278
    %v281 = vmul.f32 %v269, %v279
    %282 = vst [vmem:[#allocation8] sm:$0xff] %v280
    %283 = vst [vmem:[#allocation8 + $0x8] sm:$0xff] %v281
    // Predicated region
    $region42: #{tpu_custom_call.1} parent=1 // pred_check
      _
    $region43: #{tpu_custom_call.1} parent=1 // pred_check_branch
      %285 = sbr.rel (0) target = $region45
    $region44: #{tpu_custom_call.1} parent=1 // pred_region
      %s287 = ssub.s32 256, 256
      %288 = vsyncadd [#allocation4], %s287
      %s289 = sshll.u32 [#allocation8], 4
      %s290 = int_to_ptr.vmem [resolvable:$true] %s289
      %295 = dma.vmem_to_hbm [thread:$0]  %s290, 256, %s7, [#allocation4], 128, 128, 8
    $region45: #{tpu_custom_call.1} parent=1 // pred_fallthru
      _
    // Predicated region
    $region46: #{tpu_custom_call.1} parent=1 // pred_check
      _
    $region47: #{tpu_custom_call.1} parent=1 // pred_check_branch
      %297 = sbr.rel (0) target = $region49
    $region48: #{tpu_custom_call.1} parent=1 // pred_region
      %298 = dma.done [#allocation4], 256
    $region49: #{tpu_custom_call.1} parent=1 // pred_fallthru
      _
    %299 = vsyncpa [#allocation3], 1
    %300 = vsyncpa [#allocation6], 1
    %301 = vsyncpa [#allocation4], 1

// kernel: tpu_custom_call.1
$region0: #{tpu_custom_call.1}
  #allocation0 [shape = 'u32[]', space=smem, size = 0x4, offset = 0x4, fixed_abs, tag = 'smem constant byte address 0x4 - core index']
  #allocation1 [shape = 'u32[144,128]{1,0:T(1,128)}', space=vmem, size = 0x12000, scoped, tag = 'internal scratch']
  %s0 = inlined_call_operand.hbm [shape: bf16[16,32], index: 0, kind: input, shape index: {}]
  %s1 = inlined_call_operand.hbm [shape: bf16[32,32], index: 1, kind: input, shape index: {}]
  %s2 = inlined_call_operand.vmem [shape: f32[1,32], index: 2, kind: input, shape index: {}]
  %s3 = inlined_call_operand.vmem [shape: f32[1,32], index: 3, kind: input, shape index: {}]
  %s4 = inlined_call_operand.vmem [shape: f32[1,32], index: 4, kind: input, shape index: {}]
  %s5 = inlined_call_operand.hbm [shape: bf16[32,128], index: 5, kind: input, shape index: {}]
  %s6 = inlined_call_operand.vmem [shape: f32[1,128], index: 6, kind: input, shape index: {}]
  %s7 = inlined_call_operand.hbm [shape: f32[16,128], index: 7, kind: output, shape index: {}]
  %s8 = sld [smem:[#allocation0]]
  $region50: #{tpu_custom_call.1} parent=0
    _
  %s10 = ssub.s32 1, %s8
  %s11 = scalar_select 0, %s10, %s8
  $region1: #{tpu_custom_call.1} parent=0
    #allocation2 [shape = 'u8[4096]{0}', space=vmem, size = 0x1000, scoped, tag = 'input window, operand 0, single buffered']
    #allocation3 [shape = 's32[1]{0}', space=sflag, size = 0x4, scoped, tag = 'scoped memory for tpu_custom_call.1']
    #allocation4 [shape = 's32[1]{0}', space=sflag, size = 0x4, scoped, tag = 'scoped memory for tpu_custom_call.1']
    #allocation5 [shape = 'u8[8192]{0}', space=vmem, size = 0x2000, scoped, tag = 'input window, operand 1, single buffered']
    #allocation6 [shape = 's32[1]{0}', space=sflag, size = 0x4, scoped, tag = 'scoped memory for tpu_custom_call.1']
    #allocation7 [shape = 'u8[8192]{0}', space=vmem, size = 0x2000, scoped, tag = 'input window, operand 5, single buffered']
    #allocation8 [shape = 'u8[8192]{0}', space=vmem, size = 0x2000, scoped, tag = 'output window, operand 0, single buffered']
    %12 = vsyncpa [#allocation3], 0
    %13 = vsyncpa [#allocation6], 0
    %14 = vsyncpa [#allocation4], 0
    // Predicated region
    $region2: #{tpu_custom_call.1} parent=1 // pred_check
      _
    $region3: #{tpu_custom_call.1} parent=1 // pred_check_branch
      %16 = sbr.rel (0) target = $region5
    $region4: #{tpu_custom_call.1} parent=1 // pred_region
      %s18 = ssub.s32 128, 128
      %19 = vsyncadd [#allocation3], %s18
      %s20 = sshll.u32 [#allocation2], 4
      %s21 = int_to_ptr.vmem [resolvable:$true] %s20
      %26 = dma.hbm_to_vmem [thread:$0]  %s0, 128, %s21, [#allocation3], 64, 64, 4
    $region5: #{tpu_custom_call.1} parent=1 // pred_fallthru
      _
    // Predicated region
    $region6: #{tpu_custom_call.1} parent=1 // pred_check
      _
    $region7: #{tpu_custom_call.1} parent=1 // pred_check_branch
      %28 = sbr.rel (0) target = $region9
    $region8: #{tpu_custom_call.1} parent=1 // pred_region
      %s30 = ssub.s32 256, 256
      %31 = vsyncadd [#allocation6], %s30
      %s32 = sshll.u32 [#allocation5], 4
      %s33 = int_to_ptr.vmem [resolvable:$true] %s32
      %38 = dma.hbm_to_vmem [thread:$0]  %s1, 256, %s33, [#allocation6], 64, 64, 4
    $region9: #{tpu_custom_call.1} parent=1 // pred_fallthru
      _
    // Predicated region
    $region10: #{tpu_custom_call.1} parent=1 // pred_check
      _
    $region11: #{tpu_custom_call.1} parent=1 // pred_check_branch
      %40 = sbr.rel (0) target = $region13
    $region12: #{tpu_custom_call.1} parent=1 // pred_region
      _
    $region13: #{tpu_custom_call.1} parent=1 // pred_fallthru
      _
    // Predicated region
    $region14: #{tpu_custom_call.1} parent=1 // pred_check
      _
    $region15: #{tpu_custom_call.1} parent=1 // pred_check_branch
      %42 = sbr.rel (0) target = $region17
    $region16: #{tpu_custom_call.1} parent=1 // pred_region
      _
    $region17: #{tpu_custom_call.1} parent=1 // pred_fallthru
      _
    // Predicated region
    $region18: #{tpu_custom_call.1} parent=1 // pred_check
      _
    $region19: #{tpu_custom_call.1} parent=1 // pred_check_branch
      %44 = sbr.rel (0) target = $region21
    $region20: #{tpu_custom_call.1} parent=1 // pred_region
      _
    $region21: #{tpu_custom_call.1} parent=1 // pred_fallthru
      _
    // Predicated region
    $region22: #{tpu_custom_call.1} parent=1 // pred_check
      _
    $region23: #{tpu_custom_call.1} parent=1 // pred_check_branch
      %46 = sbr.rel (0) target = $region25
    $region24: #{tpu_custom_call.1} parent=1 // pred_region
      %s48 = ssub.s32 256, 256
      %49 = vsyncadd [#allocation6], %s48
      %s50 = sshll.u32 [#allocation7], 4
      %s51 = int_to_ptr.vmem [resolvable:$true] %s50
      %56 = dma.hbm_to_vmem [thread:$0]  %s5, 256, %s51, [#allocation6], 64, 64, 4
    $region25: #{tpu_custom_call.1} parent=1 // pred_fallthru
      _
    // Predicated region
    $region26: #{tpu_custom_call.1} parent=1 // pred_check
      _
    $region27: #{tpu_custom_call.1} parent=1 // pred_check_branch
      %58 = sbr.rel (0) target = $region29
    $region28: #{tpu_custom_call.1} parent=1 // pred_region
      _
    $region29: #{tpu_custom_call.1} parent=1 // pred_fallthru
      _
    // Predicated region
    $region30: #{tpu_custom_call.1} parent=1 // pred_check
      _
    $region31: #{tpu_custom_call.1} parent=1 // pred_check_branch
      %60 = sbr.rel (0) target = $region33
    $region32: #{tpu_custom_call.1} parent=1 // pred_region
      %61 = dma.done [#allocation3], 128
    $region33: #{tpu_custom_call.1} parent=1 // pred_fallthru
      _
    // Predicated region
    $region34: #{tpu_custom_call.1} parent=1 // pred_check
      _
    $region35: #{tpu_custom_call.1} parent=1 // pred_check_branch
      %63 = sbr.rel (0) target = $region37
    $region36: #{tpu_custom_call.1} parent=1 // pred_region
      %64 = dma.done [#allocation6], 256
    $region37: #{tpu_custom_call.1} parent=1 // pred_fallthru
      _
    // Predicated region
    $region38: #{tpu_custom_call.1} parent=1 // pred_check
      _
    $region39: #{tpu_custom_call.1} parent=1 // pred_check_branch
      %66 = sbr.rel (0) target = $region41
    $region40: #{tpu_custom_call.1} parent=1 // pred_region
      %67 = dma.done [#allocation6], 256
    $region41: #{tpu_custom_call.1} parent=1 // pred_fallthru
      _
    %v69 = vld [vmem:[#allocation2] sm:$0xf]
    %v70 = vld [vmem:[#allocation2 + $0x4] sm:$0xf]
    %v71 = vld [vmem:[#allocation5] sm:$0xf]
    %v72 = vld [vmem:[#allocation5 + $0x4] sm:$0xf]
    %v73 = vld [vmem:[#allocation5 + $0x8] sm:$0xf]
    %v74 = vld [vmem:[#allocation5 + $0xc] sm:$0xf]
    %v75 = vld [vmem:[%s2] sm:$0x1]
    %v77 = vlaneseq
    %v78 = vshrl.u32 %v77, 7
    %v79 = vsub.s32 0, %v78
    %v80 = vrot.slane %v75, %v79
    %v84 = vunpack.c.l.b16 %v69
    %v85 = vunpack.c.l.b16 %v70
    %v86 = vpack.c.b16 %v85, %v84
    %v91 = vunpack.c.l.b16 %v71
    %v92 = vunpack.c.l.b16 %v72
    %v93 = vunpack.c.l.b16 %v73
    %v94 = vunpack.c.l.b16 %v74
    %v95 = vpack.c.b16 %v92, %v91
    %v96 = vpack.c.b16 %v94, %v93
    %vm99 = vcmask 261120
    %v101 = vsel %vm99, %v86, 0
    %103 = vmatprep.subr.bf16.mxu0 0
    %104 = vmatpush1.bf16.msra.mxu0 0
    %105 = vmatprep.subr.bf16.mxu0 0
    %106 = vmatpush1.bf16.msra.mxu0 0
    %107 = vmatprep.subr.bf16.mxu0 0
    %108 = vmatpush1.bf16.msra.mxu0 0
    %109 = vmatprep.subr.bf16.mxu0 0
    %110 = vmatpush1.bf16.msra.mxu0 0
    %111 = vmatprep.subr.bf16.mxu0 0
    %112 = vmatpush1.bf16.msra.mxu0 0
    %113 = vmatprep.subr.bf16.mxu0 0
    %114 = vmatpush1.bf16.msra.mxu0 0
    %115 = vmatprep.subr.bf16.mxu0 0
    %116 = vmatpush1.bf16.msra.mxu0 %v96
    %117 = vmatprep.subr.bf16.mxu0 0
    %118 = vmatpush1.bf16.msra.mxu0 %v95
    %119 = vmatprep.subr.bf16.mxu0 0
    %120 = vmatpush2.bf16.msra.mxu0 0
    %121 = vmatprep.subr.bf16.mxu0 0
    %122 = vmatpush2.bf16.msra.mxu0 0
    %123 = vmatprep.subr.bf16.mxu0 0
    %124 = vmatpush2.bf16.msra.mxu0 0
    %125 = vmatprep.subr.bf16.mxu0 0
    %126 = vmatpush2.bf16.msra.mxu0 0
    %127 = vmatprep.subr.bf16.mxu0 0
    %128 = vmatpush2.bf16.msra.mxu0 0
    %129 = vmatprep.subr.bf16.mxu0 0
    %130 = vmatpush2.bf16.msra.mxu0 0
    %131 = vmatprep.subr.bf16.mxu0 0
    %132 = vmatpush2.bf16.msra.mxu0 0
    %133 = vmatprep.subr.bf16.mxu0 0
    %134 = vmatpush2.bf16.msra.mxu0 0
    %135 = vmatprep.mubr.bf16.mxu0 0
    %136 = vmatmul.mubr.bf16.gmra.mxu0 %v101
    %v137 = vpop.f32.mrf.mxu0
    %v138 = vadd.f32 %v80, %v137
    %v139 = vpop.f32.mrf.mxu0
    %v140 = vpop.f32.mrf.mxu0
    %v141 = vadd.f32 %v80, %v140
    %v142 = vpop.f32.mrf.mxu0
    %143 = vdwg.mxu0
    %v144 = vmul.f32 %v138, 0.5
    %v145 = vmul.f32 %v141, 0.5
    %v146 = vmul.f32 %v138, 0.70710677
    %v147 = vmul.f32 %v141, 0.70710677
    %v148 = verf.f32.pop %v146
    %v149 = verf.f32.pop %v147
    %v150 = vadd.f32 %v148, 1.0
    %v151 = vadd.f32 %v149, 1.0
    %v152 = vmul.f32 %v144, %v150
    %v153 = vmul.f32 %v145, %v151
    %v154 = vsel %vm99, %v152, 0.0
    %155 = vadd.xlane.f32.xlu0 %v154
    %v156 = vpop.xlane.xlu0 %155
    %v157 = vsel %vm99, %v153, 0.0
    %158 = vadd.xlane.f32.xlu0 %v157
    %v159 = vpop.xlane.xlu0 %158
    %v160 = vmul.f32 %v152, %v152
    %v161 = vmul.f32 %v153, %v153
    %v162 = vsel %vm99, %v160, 0.0
    %163 = vadd.xlane.f32.xlu0 %v162
    %v164 = vpop.xlane.xlu0 %163
    %v165 = vsel %vm99, %v161, 0.0
    %166 = vadd.xlane.f32.xlu0 %v165
    %v167 = vpop.xlane.xlu0 %166
    %v168 = vmul.f32 %v156, 0.03125
    %v169 = vmul.f32 %v159, 0.03125
    %v170 = vmul.f32 %v164, 0.03125
    %v171 = vmul.f32 %v167, 0.03125
    %v172 = vmul.f32 %v168, %v168
    %v173 = vmul.f32 %v169, %v169
    %v174 = vsub.f32 %v170, %v172
    %v175 = vsub.f32 %v171, %v173
    %v176 = vmax.f32 %v174, 0.0
    %v177 = vmax.f32 %v175, 0.0
    %v178 = vsub.f32 %v152, %v168
    %v179 = vsub.f32 %v153, %v169
    %v180 = vadd.f32 %v176, 1e-12
    %v181 = vadd.f32 %v177, 1e-12
    %v182 = vrsqrt.pop %v180
    %v183 = vrsqrt.pop %v181
    %v184 = vmul.f32 %v178, %v182
    %v185 = vmul.f32 %v179, %v183
    %v186 = vld [vmem:[%s3] sm:$0x1]
    %v188 = vlaneseq
    %v189 = vshrl.u32 %v188, 7
    %v190 = vsub.s32 0, %v189
    %v191 = vrot.slane %v186, %v190
    %v193 = vmul.f32 %v184, %v191
    %v194 = vmul.f32 %v185, %v191
    %v195 = vld [vmem:[%s4] sm:$0x1]
    %v197 = vlaneseq
    %v198 = vshrl.u32 %v197, 7
    %v199 = vsub.s32 0, %v198
    %v200 = vrot.slane %v195, %v199
    %v202 = vadd.f32 %v193, %v200
    %v203 = vadd.f32 %v194, %v200
    %v204 = vpack.c.bf16 %v203, %v202
    %v205 = vld [vmem:[#allocation7] sm:$0xf]
    %v206 = vld [vmem:[#allocation7 + $0x4] sm:$0xf]
    %v207 = vld [vmem:[#allocation7 + $0x8] sm:$0xf]
    %v208 = vld [vmem:[#allocation7 + $0xc] sm:$0xf]
    %v209 = vld [vmem:[%s6] sm:$0x1]
    %v211 = vlaneseq
    %v212 = vshrl.u32 %v211, 7
    %v213 = vsub.s32 0, %v212
    %v214 = vrot.slane %v209, %v213
    %v220 = vunpack.c.l.b16 %v205
    %v221 = vunpack.c.l.b16 %v206
    %v222 = vunpack.c.l.b16 %v207
    %v223 = vunpack.c.l.b16 %v208
    %v224 = vpack.c.b16 %v221, %v220
    %v225 = vpack.c.b16 %v223, %v222
    %v229 = vsel %vm99, %v204, 0
    %231 = vmatprep.subr.bf16.mxu0 0
    %232 = vmatpush1.bf16.msra.mxu0 0
    %233 = vmatprep.subr.bf16.mxu0 0
    %234 = vmatpush1.bf16.msra.mxu0 0
    %235 = vmatprep.subr.bf16.mxu0 0
    %236 = vmatpush1.bf16.msra.mxu0 0
    %237 = vmatprep.subr.bf16.mxu0 0
    %238 = vmatpush1.bf16.msra.mxu0 0
    %239 = vmatprep.subr.bf16.mxu0 0
    %240 = vmatpush1.bf16.msra.mxu0 0
    %241 = vmatprep.subr.bf16.mxu0 0
    %242 = vmatpush1.bf16.msra.mxu0 0
    %243 = vmatprep.subr.bf16.mxu0 0
    %244 = vmatpush1.bf16.msra.mxu0 %v225
    %245 = vmatprep.subr.bf16.mxu0 0
    %246 = vmatpush1.bf16.msra.mxu0 %v224
    %247 = vmatprep.subr.bf16.mxu0 0
    %248 = vmatpush2.bf16.msra.mxu0 0
    %249 = vmatprep.subr.bf16.mxu0 0
    %250 = vmatpush2.bf16.msra.mxu0 0
    %251 = vmatprep.subr.bf16.mxu0 0
    %252 = vmatpush2.bf16.msra.mxu0 0
    %253 = vmatprep.subr.bf16.mxu0 0
    %254 = vmatpush2.bf16.msra.mxu0 0
    %255 = vmatprep.subr.bf16.mxu0 0
    %256 = vmatpush2.bf16.msra.mxu0 0
    %257 = vmatprep.subr.bf16.mxu0 0
    %258 = vmatpush2.bf16.msra.mxu0 0
    %259 = vmatprep.subr.bf16.mxu0 0
    %260 = vmatpush2.bf16.msra.mxu0 0
    %261 = vmatprep.subr.bf16.mxu0 0
    %262 = vmatpush2.bf16.msra.mxu0 0
    %263 = vmatprep.mubr.bf16.mxu0 0
    %264 = vmatmul.mubr.bf16.gmra.mxu0 %v229
    %v265 = vpop.f32.mrf.mxu0
    %v266 = vadd.f32 %v214, %v265
    %v267 = vpop.f32.mrf.mxu0
    %v268 = vpop.f32.mrf.mxu0
    %v269 = vadd.f32 %v214, %v268
    %v270 = vpop.f32.mrf.mxu0
    %271 = vdwg.mxu0
    %v272 = vmul.f32 %v266, %v266
    %v273 = vmul.f32 %v269, %v269
    %274 = vadd.xlane.f32.xlu0 %v272
    %v275 = vpop.xlane.xlu0 %274
    %276 = vadd.xlane.f32.xlu0 %v273
    %v277 = vpop.xlane.xlu0 %276
    %v278 = vrsqrt.pop %v275
    %v279 = vrsqrt.pop %v277
    %v280 = vmul.f32 %v266, %v278
    %v281 = vmul.f32 %v269, %v279
    %282 = vst [vmem:[#allocation8] sm:$0xff] %v280
    %283 = vst [vmem:[#allocation8 + $0x8] sm:$0xff] %v281
    // Predicated region
    $region42: #{tpu_custom_call.1} parent=1 // pred_check
      _
    $region43: #{tpu_custom_call.1} parent=1 // pred_check_branch
      %285 = sbr.rel (0) target = $region45
    $region44: #{tpu_custom_call.1} parent=1 // pred_region
      %s287 = ssub.s32 256, 256
      %288 = vsyncadd [#allocation4], %s287
      %s289 = sshll.u32 [#allocation8], 4
      %s290 = int_to_ptr.vmem [resolvable:$true] %s289
      %295 = dma.vmem_to_hbm [thread:$0]  %s290, 256, %s7, [#allocation4], 128, 128, 8
    $region45: #{tpu_custom_call.1} parent=1 // pred_fallthru
      _
    // Predicated region
    $region46: #{tpu_custom_call.1} parent=1 // pred_check
      _
    $region47: #{tpu_custom_call.1} parent=1 // pred_check_branch
      %297 = sbr.rel (0) target = $region49
    $region48: #{tpu_custom_call.1} parent=1 // pred_region
      %298 = dma.done [#allocation4], 256
    $region49: #{tpu_custom_call.1} parent=1 // pred_fallthru
      _
    %299 = vsyncpa [#allocation3], 1
    %300 = vsyncpa [#allocation6], 1
    %301 = vsyncpa [#allocation4], 1

</llo_original>
